<compile_context>
chip_gen: v7x
topology: tpu7x:2x2x1
jax: 0.10.0
libtpu: 0.0.40
codegen_flags: <defaults>
</compile_context>

<pallas_src>
import jax
import jax.numpy as jnp
from jax.experimental import pallas as pl
from jax.experimental.pallas import tpu as pltpu


def residual_film_kernel(vis_ref, ins_ref, w1_ref, wc1_ref, w2_ref,
                         wc2s_ref, wc2sh_ref, p_ref, o_ref):
    """p_ref rows: 0=b1, 1=bc1, 2=b2, 3=bc2_scale, 4=bc2_shift, 5=gamma, 6=beta."""
    b1 = p_ref[0:1, :]
    bc1 = p_ref[1:2, :]
    b2 = p_ref[2:3, :]
    bsc = p_ref[3:4, :]
    bsh = p_ref[4:5, :]
    gamma = p_ref[5:6, :]
    beta = p_ref[6:7, :]

    vis = vis_ref[...]                                   # [B, V] f32
    ins = ins_ref[...]                                   # [B, I] f32

    # --- residual branch: Linear1 + ReLU (kept; added to the output at the end) ---
    h = jnp.maximum(
        jnp.dot(vis.astype(jnp.bfloat16), w1_ref[...],
                preferred_element_type=jnp.float32) + b1, 0.0)       # [B, V] f32

    # --- Linear2 ---
    x = jnp.dot(h.astype(jnp.bfloat16), w2_ref[...],
                preferred_element_type=jnp.float32) + b2             # [B, V] f32

    # --- FiLM conditioning branch: Linear(I->V) + ReLU, then scale / shift heads ---
    c = jnp.maximum(
        jnp.dot(ins.astype(jnp.bfloat16), wc1_ref[...],
                preferred_element_type=jnp.float32) + bc1, 0.0)      # [B, V] f32
    c_bf = c.astype(jnp.bfloat16)
    scale = jnp.dot(c_bf, wc2s_ref[...],
                    preferred_element_type=jnp.float32) + bsc        # [B, V] f32
    shift = jnp.dot(c_bf, wc2sh_ref[...],
                    preferred_element_type=jnp.float32) + bsh        # [B, V] f32

    # --- BatchNorm1d: training-mode batch stats, biased variance, eps=1e-5 ---
    inv_b = 1.0 / x.shape[0]
    mean = jnp.sum(x, axis=0, keepdims=True) * inv_b
    xc = x - mean
    var = jnp.sum(xc * xc, axis=0, keepdims=True) * inv_b            # two-pass, centered
    xn = xc * jax.lax.rsqrt(var + 1e-5) * gamma + beta

    # --- FiLM modulation + ReLU + residual add ---
    xf = jnp.maximum(xn * scale + shift, 0.0)
    o_ref[...] = (h + xf).astype(o_ref.dtype)


def pack_params(p):
    """One-time host-side prep: bf16 weights, split FiLM heads, [7, V] f32 param slab."""
    V = p["w1"].shape[0]
    bf16 = jnp.bfloat16
    w1 = p["w1"].astype(bf16)                    # [V, V]
    w2 = p["w2"].astype(bf16)                    # [V, V]
    wc1 = p["wc1"].astype(bf16)                  # [I, V]
    wc2s = p["wc2"][:, :V].astype(bf16)          # [V, V]  (scale head)
    wc2sh = p["wc2"][:, V:].astype(bf16)         # [V, V]  (shift head)
    pv = jnp.stack([p["b1"], p["bc1"], p["b2"],
                    p["bc2"][:V], p["bc2"][V:],
                    p["gamma"], p["beta"]], axis=0).astype(jnp.float32)   # [7, V]
    return w1, wc1, w2, wc2s, wc2sh, pv


@jax.jit
def residual_block_forward(vision, instruction, packed):
    """vision: [B, V], instruction: [B, I]; packed = pack_params(params)."""
    w1, wc1, w2, wc2s, wc2sh, pv = packed
    B, V = vision.shape

    vmem = pl.BlockSpec(memory_space=pltpu.MemorySpace.VMEM)
    out = pl.pallas_call(
        residual_film_kernel,
        out_shape=jax.ShapeDtypeStruct((B, V), jnp.float32),
        in_specs=[vmem] * 8,
        out_specs=vmem,
    )(vision.astype(jnp.float32), instruction.astype(jnp.float32),
      w1, wc1, w2, wc2s, wc2sh, pv)
    return out.astype(vision.dtype)


def reference_forward(vision, instruction, p):
    """Pure-JAX f32 reference mirroring the PyTorch module (training-mode BN)."""
    h = jnp.maximum(vision @ p["w1"] + p["b1"], 0.0)
    x = h @ p["w2"] + p["b2"]
    mean = jnp.mean(x, axis=0, keepdims=True)
    var = jnp.mean((x - mean) ** 2, axis=0, keepdims=True)
    x = (x - mean) / jnp.sqrt(var + 1e-5) * p["gamma"] + p["beta"]
    c = jnp.maximum(instruction @ p["wc1"] + p["bc1"], 0.0)
    c2 = c @ p["wc2"] + p["bc2"]
    V = x.shape[1]
    x = x * c2[:, :V] + c2[:, V:]
    x = jnp.maximum(x, 0.0)
    return h + x


if __name__ == "__main__":
    B = 8            # batch
    V = 32           # vision_dim
    I = 16           # instruct_dim

    key = jax.random.PRNGKey(0)
    keys = jax.random.split(key, 12)

    # Deterministic synthetic parameters (Linear weights stored [in, out], i.e. W.T).
    params = {
        "w1":    0.1 * jax.random.normal(keys[0], (V, V), jnp.float32),
        "b1":    0.1 * jax.random.normal(keys[1], (V,), jnp.float32),
        "w2":    0.1 * jax.random.normal(keys[2], (V, V), jnp.float32),
        "b2":    0.1 * jax.random.normal(keys[3], (V,), jnp.float32),
        "wc1":   0.1 * jax.random.normal(keys[4], (I, V), jnp.float32),
        "bc1":   0.1 * jax.random.normal(keys[5], (V,), jnp.float32),
        "wc2":   0.1 * jax.random.normal(keys[6], (V, 2 * V), jnp.float32),
        "bc2":   0.1 * jax.random.normal(keys[7], (2 * V,), jnp.float32),
        "gamma": 1.0 + 0.1 * jax.random.normal(keys[8], (V,), jnp.float32),
        "beta":  0.1 * jax.random.normal(keys[9], (V,), jnp.float32),
    }

    vision = jax.random.normal(keys[10], (B, V), jnp.float32)
    instruction = jax.random.normal(keys[11], (B, I), jnp.float32)

    packed = pack_params(params)             # one-time host-side weight prep

    out = residual_block_forward(vision, instruction, packed)
    out = jax.block_until_ready(out)

    ref = reference_forward(vision, instruction, params)
    assert out.shape == (B, V)
    # bf16 weights on the MXU -> looser tolerance vs. the f32 reference (per review).
    assert jnp.allclose(out, ref, atol=3e-2, rtol=3e-2)

    print("KERNEL_OK")
</pallas_src>

<mosaic_0001>
module attributes {stable_mosaic.version = 11 : i64} {
  func.func @residual_film_kernel(%arg0: memref<8x32xf32, #tpu.memory_space<vmem>>, %arg1: memref<8x16xf32, #tpu.memory_space<vmem>>, %arg2: memref<32x32xbf16, #tpu.memory_space<vmem>>, %arg3: memref<16x32xbf16, #tpu.memory_space<vmem>>, %arg4: memref<32x32xbf16, #tpu.memory_space<vmem>>, %arg5: memref<32x32xbf16, #tpu.memory_space<vmem>>, %arg6: memref<32x32xbf16, #tpu.memory_space<vmem>>, %arg7: memref<7x32xf32, #tpu.memory_space<vmem>>, %arg8: memref<8x32xf32, #tpu.memory_space<vmem>>) attributes {dimension_semantics = [], scalar_prefetch = 0 : i64, scratch_operands = 0 : i64, tpu.core_type = #tpu.core_type<tc>} {
    %c0 = arith.constant 0 : index
    %c0_0 = arith.constant 0 : index
    %0 = vector.load %arg7[%c0, %c0_0] : memref<7x32xf32, #tpu.memory_space<vmem>>, vector<1x32xf32>
    %c1 = arith.constant 1 : index
    %c0_1 = arith.constant 0 : index
    %1 = vector.load %arg7[%c1, %c0_1] : memref<7x32xf32, #tpu.memory_space<vmem>>, vector<1x32xf32>
    %c2 = arith.constant 2 : index
    %c0_2 = arith.constant 0 : index
    %2 = vector.load %arg7[%c2, %c0_2] : memref<7x32xf32, #tpu.memory_space<vmem>>, vector<1x32xf32>
    %c3 = arith.constant 3 : index
    %c0_3 = arith.constant 0 : index
    %3 = vector.load %arg7[%c3, %c0_3] : memref<7x32xf32, #tpu.memory_space<vmem>>, vector<1x32xf32>
    %c4 = arith.constant 4 : index
    %c0_4 = arith.constant 0 : index
    %4 = vector.load %arg7[%c4, %c0_4] : memref<7x32xf32, #tpu.memory_space<vmem>>, vector<1x32xf32>
    %c5 = arith.constant 5 : index
    %c0_5 = arith.constant 0 : index
    %5 = vector.load %arg7[%c5, %c0_5] : memref<7x32xf32, #tpu.memory_space<vmem>>, vector<1x32xf32>
    %c6 = arith.constant 6 : index
    %c0_6 = arith.constant 0 : index
    %6 = vector.load %arg7[%c6, %c0_6] : memref<7x32xf32, #tpu.memory_space<vmem>>, vector<1x32xf32>
    %c0_7 = arith.constant 0 : index
    %c0_8 = arith.constant 0 : index
    %7 = vector.load %arg0[%c0_7, %c0_8] : memref<8x32xf32, #tpu.memory_space<vmem>>, vector<8x32xf32>
    %c0_9 = arith.constant 0 : index
    %c0_10 = arith.constant 0 : index
    %8 = vector.load %arg1[%c0_9, %c0_10] : memref<8x16xf32, #tpu.memory_space<vmem>>, vector<8x16xf32>
    %9 = arith.truncf %7 : vector<8x32xf32> to vector<8x32xbf16>
    %c0_11 = arith.constant 0 : index
    %c0_12 = arith.constant 0 : index
    %10 = vector.load %arg2[%c0_11, %c0_12] : memref<32x32xbf16, #tpu.memory_space<vmem>>, vector<32x32xbf16>
    %cst = arith.constant dense<0.000000e+00> : vector<8x32xf32>
    %11 = tpu.matmul %9, %10, %cst {dimension_numbers = #tpu.dot_dimension_numbers<[1], [0], [0], [1], [0, 0, 1, 1], [], []>} : vector<8x32xbf16>, vector<32x32xbf16>, vector<8x32xf32> -> vector<8x32xf32>
    %12 = vector.broadcast %0 : vector<1x32xf32> to vector<8x32xf32>
    %13 = arith.addf %11, %12 : vector<8x32xf32>
    %cst_13 = arith.constant 0.000000e+00 : f32
    %14 = vector.broadcast %cst_13 : f32 to vector<8x32xf32>
    %15 = arith.maximumf %13, %14 : vector<8x32xf32>
    %16 = arith.truncf %15 : vector<8x32xf32> to vector<8x32xbf16>
    %c0_14 = arith.constant 0 : index
    %c0_15 = arith.constant 0 : index
    %17 = vector.load %arg4[%c0_14, %c0_15] : memref<32x32xbf16, #tpu.memory_space<vmem>>, vector<32x32xbf16>
    %cst_16 = arith.constant dense<0.000000e+00> : vector<8x32xf32>
    %18 = tpu.matmul %16, %17, %cst_16 {dimension_numbers = #tpu.dot_dimension_numbers<[1], [0], [0], [1], [0, 0, 1, 1], [], []>} : vector<8x32xbf16>, vector<32x32xbf16>, vector<8x32xf32> -> vector<8x32xf32>
    %19 = vector.broadcast %2 : vector<1x32xf32> to vector<8x32xf32>
    %20 = arith.addf %18, %19 : vector<8x32xf32>
    %21 = arith.truncf %8 : vector<8x16xf32> to vector<8x16xbf16>
    %c0_17 = arith.constant 0 : index
    %c0_18 = arith.constant 0 : index
    %22 = vector.load %arg3[%c0_17, %c0_18] : memref<16x32xbf16, #tpu.memory_space<vmem>>, vector<16x32xbf16>
    %cst_19 = arith.constant dense<0.000000e+00> : vector<8x32xf32>
    %23 = tpu.matmul %21, %22, %cst_19 {dimension_numbers = #tpu.dot_dimension_numbers<[1], [0], [0], [1], [0, 0, 1, 1], [], []>} : vector<8x16xbf16>, vector<16x32xbf16>, vector<8x32xf32> -> vector<8x32xf32>
    %24 = vector.broadcast %1 : vector<1x32xf32> to vector<8x32xf32>
    %25 = arith.addf %23, %24 : vector<8x32xf32>
    %cst_20 = arith.constant 0.000000e+00 : f32
    %26 = vector.broadcast %cst_20 : f32 to vector<8x32xf32>
    %27 = arith.maximumf %25, %26 : vector<8x32xf32>
    %28 = arith.truncf %27 : vector<8x32xf32> to vector<8x32xbf16>
    %c0_21 = arith.constant 0 : index
    %c0_22 = arith.constant 0 : index
    %29 = vector.load %arg5[%c0_21, %c0_22] : memref<32x32xbf16, #tpu.memory_space<vmem>>, vector<32x32xbf16>
    %cst_23 = arith.constant dense<0.000000e+00> : vector<8x32xf32>
    %30 = tpu.matmul %28, %29, %cst_23 {dimension_numbers = #tpu.dot_dimension_numbers<[1], [0], [0], [1], [0, 0, 1, 1], [], []>} : vector<8x32xbf16>, vector<32x32xbf16>, vector<8x32xf32> -> vector<8x32xf32>
    %31 = vector.broadcast %3 : vector<1x32xf32> to vector<8x32xf32>
    %32 = arith.addf %30, %31 : vector<8x32xf32>
    %c0_24 = arith.constant 0 : index
    %c0_25 = arith.constant 0 : index
    %33 = vector.load %arg6[%c0_24, %c0_25] : memref<32x32xbf16, #tpu.memory_space<vmem>>, vector<32x32xbf16>
    %cst_26 = arith.constant dense<0.000000e+00> : vector<8x32xf32>
    %34 = tpu.matmul %28, %33, %cst_26 {dimension_numbers = #tpu.dot_dimension_numbers<[1], [0], [0], [1], [0, 0, 1, 1], [], []>} : vector<8x32xbf16>, vector<32x32xbf16>, vector<8x32xf32> -> vector<8x32xf32>
    %35 = vector.broadcast %4 : vector<1x32xf32> to vector<8x32xf32>
    %36 = arith.addf %34, %35 : vector<8x32xf32>
    %cst_27 = arith.constant dense<0.000000e+00> : vector<32xf32>
    %37 = vector.multi_reduction <add>, %20, %cst_27 [0] : vector<8x32xf32> to vector<32xf32>
    %38 = vector.shape_cast %37 : vector<32xf32> to vector<1x32xf32>
    %cst_28 = arith.constant 1.250000e-01 : f32
    %39 = vector.broadcast %cst_28 : f32 to vector<1x32xf32>
    %40 = arith.mulf %38, %39 : vector<1x32xf32>
    %41 = vector.broadcast %40 : vector<1x32xf32> to vector<8x32xf32>
    %42 = arith.subf %20, %41 : vector<8x32xf32>
    %43 = arith.mulf %42, %42 : vector<8x32xf32>
    %cst_29 = arith.constant dense<0.000000e+00> : vector<32xf32>
    %44 = vector.multi_reduction <add>, %43, %cst_29 [0] : vector<8x32xf32> to vector<32xf32>
    %45 = vector.shape_cast %44 : vector<32xf32> to vector<1x32xf32>
    %cst_30 = arith.constant 1.250000e-01 : f32
    %46 = vector.broadcast %cst_30 : f32 to vector<1x32xf32>
    %47 = arith.mulf %45, %46 : vector<1x32xf32>
    %cst_31 = arith.constant 9.99999974E-6 : f32
    %48 = vector.broadcast %cst_31 : f32 to vector<1x32xf32>
    %49 = arith.addf %47, %48 : vector<1x32xf32>
    %50 = math.rsqrt %49 : vector<1x32xf32>
    %51 = vector.broadcast %50 : vector<1x32xf32> to vector<8x32xf32>
    %52 = arith.mulf %42, %51 : vector<8x32xf32>
    %53 = vector.broadcast %5 : vector<1x32xf32> to vector<8x32xf32>
    %54 = arith.mulf %52, %53 : vector<8x32xf32>
    %55 = vector.broadcast %6 : vector<1x32xf32> to vector<8x32xf32>
    %56 = arith.addf %54, %55 : vector<8x32xf32>
    %57 = arith.mulf %56, %32 : vector<8x32xf32>
    %58 = arith.addf %57, %36 : vector<8x32xf32>
    %cst_32 = arith.constant 0.000000e+00 : f32
    %59 = vector.broadcast %cst_32 : f32 to vector<8x32xf32>
    %60 = arith.maximumf %58, %59 : vector<8x32xf32>
    %61 = arith.addf %15, %60 : vector<8x32xf32>
    %c0_33 = arith.constant 0 : index
    %c0_34 = arith.constant 0 : index
    %62 = vector.load %arg8[%c0_33, %c0_34] : memref<8x32xf32, #tpu.memory_space<vmem>>, vector<8x32xf32>
    tpu.vector_store %arg8[%c0_33, %c0_34], %61 {strides = array<i32>} : memref<8x32xf32, #tpu.memory_space<vmem>>, vector<8x32xf32>,
    return
  }
}

</mosaic_0001>

<llo_original>
// kernel: residual_block_forward.1
$region0: #{residual_block_forward.1}
  #allocation0 [shape = 'u32[]', space=smem, size = 0x4, offset = 0x4, fixed_abs, tag = 'smem constant byte address 0x4 - core index']
  #allocation1 [shape = 'u32[144,128]{1,0:T(1,128)}', space=vmem, size = 0x12000, scoped, tag = 'internal scratch']
  %s0 = inlined_call_operand.hbm [shape: f32[8,32], index: 0, kind: input, shape index: {}]
  %s1 = inlined_call_operand.hbm [shape: f32[8,16], index: 1, kind: input, shape index: {}]
  %s2 = inlined_call_operand.hbm [shape: bf16[32,32], index: 2, kind: input, shape index: {}]
  %s3 = inlined_call_operand.hbm [shape: bf16[16,32], index: 3, kind: input, shape index: {}]
  %s4 = inlined_call_operand.hbm [shape: bf16[32,32], index: 4, kind: input, shape index: {}]
  %s5 = inlined_call_operand.vmem [shape: bf16[32,32], index: 5, kind: input, shape index: {}]
  %s6 = inlined_call_operand.hbm [shape: bf16[32,32], index: 6, kind: input, shape index: {}]
  %s7 = inlined_call_operand.vmem [shape: f32[7,32], index: 7, kind: input, shape index: {}]
  %s8 = inlined_call_operand.hbm [shape: f32[8,32], index: 8, kind: output, shape index: {}]
  %s9 = sld [smem:[#allocation0]]
  $region66: #{residual_block_forward.1} parent=0
    _
  %s11 = ssub.s32 1, %s9
  %s12 = scalar_select 0, %s11, %s9
  $region1: #{residual_block_forward.1} parent=0
    #allocation2 [shape = 'u8[4096]{0}', space=vmem, size = 0x1000, scoped, tag = 'input window, operand 0, single buffered']
    #allocation3 [shape = 's32[1]{0}', space=sflag, size = 0x4, scoped, tag = 'scoped memory for residual_block_forward.1']
    #allocation4 [shape = 's32[1]{0}', space=sflag, size = 0x4, scoped, tag = 'scoped memory for residual_block_forward.1']
    #allocation5 [shape = 'u8[4096]{0}', space=vmem, size = 0x1000, scoped, tag = 'input window, operand 1, single buffered']
    #allocation6 [shape = 's32[1]{0}', space=sflag, size = 0x4, scoped, tag = 'scoped memory for residual_block_forward.1']
    #allocation7 [shape = 'u8[8192]{0}', space=vmem, size = 0x2000, scoped, tag = 'input window, operand 2, single buffered']
    #allocation8 [shape = 'u8[4096]{0}', space=vmem, size = 0x1000, scoped, tag = 'input window, operand 3, single buffered']
    #allocation9 [shape = 's32[1]{0}', space=sflag, size = 0x4, scoped, tag = 'scoped memory for residual_block_forward.1']
    #allocation10 [shape = 'u8[8192]{0}', space=vmem, size = 0x2000, scoped, tag = 'input window, operand 4, single buffered']
    #allocation11 [shape = 'u8[8192]{0}', space=vmem, size = 0x2000, scoped, tag = 'input window, operand 6, single buffered']
    #allocation12 [shape = 's32[1]{0}', space=sflag, size = 0x4, scoped, tag = 'scoped memory for residual_block_forward.1']
    #allocation13 [shape = 'u8[4096]{0}', space=vmem, size = 0x1000, scoped, tag = 'output window, operand 0, single buffered']
    %13 = vsyncpa [#allocation3], 0
    %14 = vsyncpa [#allocation6], 0
    %15 = vsyncpa [#allocation9], 0
    %16 = vsyncpa [#allocation12], 0
    %17 = vsyncpa [#allocation4], 0
    // Predicated region
    $region2: #{residual_block_forward.1} parent=1 // pred_check
      _
    $region3: #{residual_block_forward.1} parent=1 // pred_check_branch
      %19 = sbr.rel (0) target = $region5
    $region4: #{residual_block_forward.1} parent=1 // pred_region
      %s21 = ssub.s32 128, 128
      %22 = vsyncadd [#allocation3], %s21
      %s24 = sshll.u32 [#allocation2], 4
      %s25 = int_to_ptr.vmem [resolvable:$true] %s24
      %27 = dma.hbm_to_vmem [thread:$0]  %s0, 128, %s25, [#allocation3]
    $region5: #{residual_block_forward.1} parent=1 // pred_fallthru
      _
    // Predicated region
    $region6: #{residual_block_forward.1} parent=1 // pred_check
      _
    $region7: #{residual_block_forward.1} parent=1 // pred_check_branch
      %29 = sbr.rel (0) target = $region9
    $region8: #{residual_block_forward.1} parent=1 // pred_region
      %s31 = ssub.s32 128, 128
      %32 = vsyncadd [#allocation6], %s31
      %s34 = sshll.u32 [#allocation5], 4
      %s35 = int_to_ptr.vmem [resolvable:$true] %s34
      %37 = dma.hbm_to_vmem [thread:$0]  %s1, 128, %s35, [#allocation6]
    $region9: #{residual_block_forward.1} parent=1 // pred_fallthru
      _
    // Predicated region
    $region10: #{residual_block_forward.1} parent=1 // pred_check
      _
    $region11: #{residual_block_forward.1} parent=1 // pred_check_branch
      %39 = sbr.rel (0) target = $region13
    $region12: #{residual_block_forward.1} parent=1 // pred_region
      %s41 = ssub.s32 256, 256
      %42 = vsyncadd [#allocation6], %s41
      %s43 = sshll.u32 [#allocation7], 4
      %s44 = int_to_ptr.vmem [resolvable:$true] %s43
      %49 = dma.hbm_to_vmem [thread:$0]  %s2, 256, %s44, [#allocation6], 64, 64, 4
    $region13: #{residual_block_forward.1} parent=1 // pred_fallthru
      _
    // Predicated region
    $region14: #{residual_block_forward.1} parent=1 // pred_check
      _
    $region15: #{residual_block_forward.1} parent=1 // pred_check_branch
      %51 = sbr.rel (0) target = $region17
    $region16: #{residual_block_forward.1} parent=1 // pred_region
      %s53 = ssub.s32 128, 128
      %54 = vsyncadd [#allocation9], %s53
      %s55 = sshll.u32 [#allocation8], 4
      %s56 = int_to_ptr.vmem [resolvable:$true] %s55
      %61 = dma.hbm_to_vmem [thread:$0]  %s3, 128, %s56, [#allocation9], 64, 64, 4
    $region17: #{residual_block_forward.1} parent=1 // pred_fallthru
      _
    // Predicated region
    $region18: #{residual_block_forward.1} parent=1 // pred_check
      _
    $region19: #{residual_block_forward.1} parent=1 // pred_check_branch
      %63 = sbr.rel (0) target = $region21
    $region20: #{residual_block_forward.1} parent=1 // pred_region
      %s65 = ssub.s32 256, 256
      %66 = vsyncadd [#allocation9], %s65
      %s67 = sshll.u32 [#allocation10], 4
      %s68 = int_to_ptr.vmem [resolvable:$true] %s67
      %73 = dma.hbm_to_vmem [thread:$0]  %s4, 256, %s68, [#allocation9], 64, 64, 4
    $region21: #{residual_block_forward.1} parent=1 // pred_fallthru
      _
    // Predicated region
    $region22: #{residual_block_forward.1} parent=1 // pred_check
      _
    $region23: #{residual_block_forward.1} parent=1 // pred_check_branch
      %75 = sbr.rel (0) target = $region25
    $region24: #{residual_block_forward.1} parent=1 // pred_region
      _
    $region25: #{residual_block_forward.1} parent=1 // pred_fallthru
      _
    // Predicated region
    $region26: #{residual_block_forward.1} parent=1 // pred_check
      _
    $region27: #{residual_block_forward.1} parent=1 // pred_check_branch
      %77 = sbr.rel (0) target = $region29
    $region28: #{residual_block_forward.1} parent=1 // pred_region
      %s79 = ssub.s32 256, 256
      %80 = vsyncadd [#allocation12], %s79
      %s81 = sshll.u32 [#allocation11], 4
      %s82 = int_to_ptr.vmem [resolvable:$true] %s81
      %87 = dma.hbm_to_vmem [thread:$0]  %s6, 256, %s82, [#allocation12], 64, 64, 4
    $region29: #{residual_block_forward.1} parent=1 // pred_fallthru
      _
    // Predicated region
    $region30: #{residual_block_forward.1} parent=1 // pred_check
      _
    $region31: #{residual_block_forward.1} parent=1 // pred_check_branch
      %89 = sbr.rel (0) target = $region33
    $region32: #{residual_block_forward.1} parent=1 // pred_region
      _
    $region33: #{residual_block_forward.1} parent=1 // pred_fallthru
      _
    // Predicated region
    $region34: #{residual_block_forward.1} parent=1 // pred_check
      _
    $region35: #{residual_block_forward.1} parent=1 // pred_check_branch
      %91 = sbr.rel (0) target = $region37
    $region36: #{residual_block_forward.1} parent=1 // pred_region
      %92 = dma.done [#allocation3], 128
    $region37: #{residual_block_forward.1} parent=1 // pred_fallthru
      _
    // Predicated region
    $region38: #{residual_block_forward.1} parent=1 // pred_check
      _
    $region39: #{residual_block_forward.1} parent=1 // pred_check_branch
      %94 = sbr.rel (0) target = $region41
    $region40: #{residual_block_forward.1} parent=1 // pred_region
      %95 = dma.done [#allocation6], 128
    $region41: #{residual_block_forward.1} parent=1 // pred_fallthru
      _
    // Predicated region
    $region42: #{residual_block_forward.1} parent=1 // pred_check
      _
    $region43: #{residual_block_forward.1} parent=1 // pred_check_branch
      %97 = sbr.rel (0) target = $region45
    $region44: #{residual_block_forward.1} parent=1 // pred_region
      %98 = dma.done [#allocation6], 256
    $region45: #{residual_block_forward.1} parent=1 // pred_fallthru
      _
    // Predicated region
    $region46: #{residual_block_forward.1} parent=1 // pred_check
      _
    $region47: #{residual_block_forward.1} parent=1 // pred_check_branch
      %100 = sbr.rel (0) target = $region49
    $region48: #{residual_block_forward.1} parent=1 // pred_region
      %101 = dma.done [#allocation9], 128
    $region49: #{residual_block_forward.1} parent=1 // pred_fallthru
      _
    // Predicated region
    $region50: #{residual_block_forward.1} parent=1 // pred_check
      _
    $region51: #{residual_block_forward.1} parent=1 // pred_check_branch
      %103 = sbr.rel (0) target = $region53
    $region52: #{residual_block_forward.1} parent=1 // pred_region
      %104 = dma.done [#allocation9], 256
    $region53: #{residual_block_forward.1} parent=1 // pred_fallthru
      _
    // Predicated region
    $region54: #{residual_block_forward.1} parent=1 // pred_check
      _
    $region55: #{residual_block_forward.1} parent=1 // pred_check_branch
      %106 = sbr.rel (0) target = $region57
    $region56: #{residual_block_forward.1} parent=1 // pred_region
      %107 = dma.done [#allocation12], 256
    $region57: #{residual_block_forward.1} parent=1 // pred_fallthru
      _
    %v109 = vld [vmem:[%s7] sm:$0x1]
    %v110 = vld [vmem:[%s7 + $0x1] sm:$0x1]
    %v111 = vld [vmem:[%s7 + $0x2] sm:$0x1]
    %v112 = vld [vmem:[%s7 + $0x3] sm:$0x1]
    %v113 = vld [vmem:[%s7 + $0x4] sm:$0x1]
    %v114 = vld [vmem:[%s7 + $0x5] sm:$0x1]
    %v115 = vld [vmem:[%s7 + $0x6] sm:$0x1]
    %v116 = vld [vmem:[#allocation2] sm:$0xff]
    %v117 = vld [vmem:[#allocation5] sm:$0xff]
    %v118 = vpack.c.bf16 %v116, %v116
    %v119 = vld [vmem:[#allocation7] sm:$0xf]
    %v120 = vld [vmem:[#allocation7 + $0x4] sm:$0xf]
    %v121 = vld [vmem:[#allocation7 + $0x8] sm:$0xf]
    %v122 = vld [vmem:[#allocation7 + $0xc] sm:$0xf]
    %v123 = vlaneseq
    %v124 = vshrl.u32 %v123, 7
    %v125 = vsub.s32 0, %v124
    %v126 = vrot.slane %v109, %v125
    %v131 = vunpack.c.l.b16 %v119
    %v132 = vunpack.c.l.b16 %v120
    %v133 = vunpack.c.l.b16 %v121
    %v134 = vunpack.c.l.b16 %v122
    %v135 = vpack.c.b16 %v132, %v131
    %v136 = vpack.c.b16 %v134, %v133
    %vm139 = vcmask 261120
    %v141 = vsel %vm139, %v118, 0
    %143 = vmatprep.subr.bf16.mxu0 0
    %144 = vmatpush1.bf16.msra.mxu0 %v135
    %145 = vmatprep.subr.bf16.mxu0 0
    %146 = vmatpush1.bf16.msra.mxu0 %v136
    %147 = vmatprep.subr.bf16.mxu0 0
    %148 = vmatpush1.bf16.msra.mxu0 0
    %149 = vmatprep.subr.bf16.mxu0 0
    %150 = vmatpush1.bf16.msra.mxu0 0
    %151 = vmatprep.subr.bf16.mxu0 0
    %152 = vmatpush1.bf16.msra.mxu0 0
    %153 = vmatprep.subr.bf16.mxu0 0
    %154 = vmatpush1.bf16.msra.mxu0 0
    %155 = vmatprep.subr.bf16.mxu0 0
    %156 = vmatpush1.bf16.msra.mxu0 0
    %157 = vmatprep.subr.bf16.mxu0 0
    %158 = vmatpush1.bf16.msra.mxu0 0
    %159 = vmatprep.subr.bf16.mxu0 0
    %160 = vmatpush1.bf16.msra.mxu0 0
    %161 = vmatprep.subr.bf16.mxu0 0
    %162 = vmatpush1.bf16.msra.mxu0 0
    %163 = vmatprep.subr.bf16.mxu0 0
    %164 = vmatpush1.bf16.msra.mxu0 0
    %165 = vmatprep.subr.bf16.mxu0 0
    %166 = vmatpush1.bf16.msra.mxu0 0
    %167 = vmatprep.subr.bf16.mxu0 0
    %168 = vmatpush1.bf16.msra.mxu0 0
    %169 = vmatprep.subr.bf16.mxu0 0
    %170 = vmatpush1.bf16.msra.mxu0 0
    %171 = vmatprep.subr.bf16.mxu0 0
    %172 = vmatpush1.bf16.msra.mxu0 0
    %173 = vmatprep.subr.bf16.mxu0 0
    %174 = vmatpush1.bf16.msra.mxu0 0
    %175 = vmatprep.mubr.bf16.mxu0 0
    %176 = vmatmul.mubr.bf16.gmra.mrb[0].mxu0 %v141
    %v177 = vpop.f32.mrb[0].mxu0
    %v178 = vadd.f32 %v126, %v177
    %v179 = vpop.f32.mrb[0].mxu0
    %v180 = vpop.f32.mrb[0].mxu0
    %v181 = vpop.f32.mrb[0].mxu0
    %182 = vdwg.mxu0
    %v183 = vmax.f32 %v178, 0.0
    %v184 = vpack.c.bf16 %v183, %v183
    %v185 = vld [vmem:[#allocation10] sm:$0xf]
    %v186 = vld [vmem:[#allocation10 + $0x4] sm:$0xf]
    %v187 = vld [vmem:[#allocation10 + $0x8] sm:$0xf]
    %v188 = vld [vmem:[#allocation10 + $0xc] sm:$0xf]
    %v189 = vlaneseq
    %v190 = vshrl.u32 %v189, 7
    %v191 = vsub.s32 0, %v190
    %v192 = vrot.slane %v111, %v191
    %v197 = vunpack.c.l.b16 %v185
    %v198 = vunpack.c.l.b16 %v186
    %v199 = vunpack.c.l.b16 %v187
    %v200 = vunpack.c.l.b16 %v188
    %v201 = vpack.c.b16 %v198, %v197
    %v202 = vpack.c.b16 %v200, %v199
    %v206 = vsel %vm139, %v184, 0
    %208 = vmatprep.subr.bf16.mxu0 0
    %209 = vmatpush1.bf16.msra.mxu0 %v201
    %210 = vmatprep.subr.bf16.mxu0 0
    %211 = vmatpush1.bf16.msra.mxu0 %v202
    %212 = vmatprep.subr.bf16.mxu0 0
    %213 = vmatpush1.bf16.msra.mxu0 0
    %214 = vmatprep.subr.bf16.mxu0 0
    %215 = vmatpush1.bf16.msra.mxu0 0
    %216 = vmatprep.subr.bf16.mxu0 0
    %217 = vmatpush1.bf16.msra.mxu0 0
    %218 = vmatprep.subr.bf16.mxu0 0
    %219 = vmatpush1.bf16.msra.mxu0 0
    %220 = vmatprep.subr.bf16.mxu0 0
    %221 = vmatpush1.bf16.msra.mxu0 0
    %222 = vmatprep.subr.bf16.mxu0 0
    %223 = vmatpush1.bf16.msra.mxu0 0
    %224 = vmatprep.subr.bf16.mxu0 0
    %225 = vmatpush1.bf16.msra.mxu0 0
    %226 = vmatprep.subr.bf16.mxu0 0
    %227 = vmatpush1.bf16.msra.mxu0 0
    %228 = vmatprep.subr.bf16.mxu0 0
    %229 = vmatpush1.bf16.msra.mxu0 0
    %230 = vmatprep.subr.bf16.mxu0 0
    %231 = vmatpush1.bf16.msra.mxu0 0
    %232 = vmatprep.subr.bf16.mxu0 0
    %233 = vmatpush1.bf16.msra.mxu0 0
    %234 = vmatprep.subr.bf16.mxu0 0
    %235 = vmatpush1.bf16.msra.mxu0 0
    %236 = vmatprep.subr.bf16.mxu0 0
    %237 = vmatpush1.bf16.msra.mxu0 0
    %238 = vmatprep.subr.bf16.mxu0 0
    %239 = vmatpush1.bf16.msra.mxu0 0
    %240 = vmatprep.mubr.bf16.mxu0 0
    %241 = vmatmul.mubr.bf16.gmra.mrb[0].mxu0 %v206
    %v242 = vpop.f32.mrb[0].mxu0
    %v243 = vadd.f32 %v192, %v242
    %v244 = vpop.f32.mrb[0].mxu0
    %v245 = vpop.f32.mrb[0].mxu0
    %v246 = vpop.f32.mrb[0].mxu0
    %247 = vdwg.mxu0
    %v248 = vpack.c.bf16 %v117, %v117
    %v249 = vld [vmem:[#allocation8] sm:$0xf]
    %v250 = vld [vmem:[#allocation8 + $0x4] sm:$0xf]
    %v251 = vlaneseq
    %v252 = vshrl.u32 %v251, 7
    %v253 = vsub.s32 0, %v252
    %v254 = vrot.slane %v110, %v253
    %v257 = vunpack.c.l.b16 %v249
    %v258 = vunpack.c.l.b16 %v250
    %v259 = vpack.c.b16 %v258, %v257
    %vm261 = vcmask 130048
    %v263 = vsel %vm261, %v248, 0
    %265 = vmatprep.subr.bf16.mxu0 0
    %266 = vmatpush1.bf16.msra.mxu0 %v259
    %267 = vmatprep.subr.bf16.mxu0 0
    %268 = vmatpush1.bf16.msra.mxu0 0
    %269 = vmatprep.subr.bf16.mxu0 0
    %270 = vmatpush1.bf16.msra.mxu0 0
    %271 = vmatprep.subr.bf16.mxu0 0
    %272 = vmatpush1.bf16.msra.mxu0 0
    %273 = vmatprep.subr.bf16.mxu0 0
    %274 = vmatpush1.bf16.msra.mxu0 0
    %275 = vmatprep.subr.bf16.mxu0 0
    %276 = vmatpush1.bf16.msra.mxu0 0
    %277 = vmatprep.subr.bf16.mxu0 0
    %278 = vmatpush1.bf16.msra.mxu0 0
    %279 = vmatprep.subr.bf16.mxu0 0
    %280 = vmatpush1.bf16.msra.mxu0 0
    %281 = vmatprep.subr.bf16.mxu0 0
    %282 = vmatpush1.bf16.msra.mxu0 0
    %283 = vmatprep.subr.bf16.mxu0 0
    %284 = vmatpush1.bf16.msra.mxu0 0
    %285 = vmatprep.subr.bf16.mxu0 0
    %286 = vmatpush1.bf16.msra.mxu0 0
    %287 = vmatprep.subr.bf16.mxu0 0
    %288 = vmatpush1.bf16.msra.mxu0 0
    %289 = vmatprep.subr.bf16.mxu0 0
    %290 = vmatpush1.bf16.msra.mxu0 0
    %291 = vmatprep.subr.bf16.mxu0 0
    %292 = vmatpush1.bf16.msra.mxu0 0
    %293 = vmatprep.subr.bf16.mxu0 0
    %294 = vmatpush1.bf16.msra.mxu0 0
    %295 = vmatprep.subr.bf16.mxu0 0
    %296 = vmatpush1.bf16.msra.mxu0 0
    %297 = vmatprep.mubr.bf16.mxu0 0
    %298 = vmatmul.mubr.bf16.gmra.mrb[0].mxu0 %v263
    %v299 = vpop.f32.mrb[0].mxu0
    %v300 = vadd.f32 %v254, %v299
    %v301 = vpop.f32.mrb[0].mxu0
    %v302 = vpop.f32.mrb[0].mxu0
    %v303 = vpop.f32.mrb[0].mxu0
    %304 = vdwg.mxu0
    %v305 = vmax.f32 %v300, 0.0
    %v306 = vpack.c.bf16 %v305, %v305
    %v307 = vld [vmem:[%s5] sm:$0xf]
    %v308 = vld [vmem:[%s5 + $0x4] sm:$0xf]
    %v309 = vld [vmem:[%s5 + $0x8] sm:$0xf]
    %v310 = vld [vmem:[%s5 + $0xc] sm:$0xf]
    %v311 = vlaneseq
    %v312 = vshrl.u32 %v311, 7
    %v313 = vsub.s32 0, %v312
    %v314 = vrot.slane %v112, %v313
    %v319 = vunpack.c.l.b16 %v307
    %v320 = vunpack.c.l.b16 %v308
    %v321 = vunpack.c.l.b16 %v309
    %v322 = vunpack.c.l.b16 %v310
    %v323 = vpack.c.b16 %v320, %v319
    %v324 = vpack.c.b16 %v322, %v321
    %v328 = vsel %vm139, %v306, 0
    %330 = vmatprep.subr.bf16.mxu0 0
    %331 = vmatpush1.bf16.msra.mxu0 %v323
    %332 = vmatprep.subr.bf16.mxu0 0
    %333 = vmatpush1.bf16.msra.mxu0 %v324
    %334 = vmatprep.subr.bf16.mxu0 0
    %335 = vmatpush1.bf16.msra.mxu0 0
    %336 = vmatprep.subr.bf16.mxu0 0
    %337 = vmatpush1.bf16.msra.mxu0 0
    %338 = vmatprep.subr.bf16.mxu0 0
    %339 = vmatpush1.bf16.msra.mxu0 0
    %340 = vmatprep.subr.bf16.mxu0 0
    %341 = vmatpush1.bf16.msra.mxu0 0
    %342 = vmatprep.subr.bf16.mxu0 0
    %343 = vmatpush1.bf16.msra.mxu0 0
    %344 = vmatprep.subr.bf16.mxu0 0
    %345 = vmatpush1.bf16.msra.mxu0 0
    %346 = vmatprep.subr.bf16.mxu0 0
    %347 = vmatpush1.bf16.msra.mxu0 0
    %348 = vmatprep.subr.bf16.mxu0 0
    %349 = vmatpush1.bf16.msra.mxu0 0
    %350 = vmatprep.subr.bf16.mxu0 0
    %351 = vmatpush1.bf16.msra.mxu0 0
    %352 = vmatprep.subr.bf16.mxu0 0
    %353 = vmatpush1.bf16.msra.mxu0 0
    %354 = vmatprep.subr.bf16.mxu0 0
    %355 = vmatpush1.bf16.msra.mxu0 0
    %356 = vmatprep.subr.bf16.mxu0 0
    %357 = vmatpush1.bf16.msra.mxu0 0
    %358 = vmatprep.subr.bf16.mxu0 0
    %359 = vmatpush1.bf16.msra.mxu0 0
    %360 = vmatprep.subr.bf16.mxu0 0
    %361 = vmatpush1.bf16.msra.mxu0 0
    %362 = vmatprep.mubr.bf16.mxu0 0
    %363 = vmatmul.mubr.bf16.gmra.mrb[0].mxu0 %v328
    %v364 = vpop.f32.mrb[0].mxu0
    %v365 = vadd.f32 %v314, %v364
    %v366 = vpop.f32.mrb[0].mxu0
    %v367 = vpop.f32.mrb[0].mxu0
    %v368 = vpop.f32.mrb[0].mxu0
    %369 = vdwg.mxu0
    %v370 = vld [vmem:[#allocation11] sm:$0xf]
    %v371 = vld [vmem:[#allocation11 + $0x4] sm:$0xf]
    %v372 = vld [vmem:[#allocation11 + $0x8] sm:$0xf]
    %v373 = vld [vmem:[#allocation11 + $0xc] sm:$0xf]
    %v374 = vlaneseq
    %v375 = vshrl.u32 %v374, 7
    %v376 = vsub.s32 0, %v375
    %v377 = vrot.slane %v113, %v376
    %v382 = vunpack.c.l.b16 %v370
    %v383 = vunpack.c.l.b16 %v371
    %v384 = vunpack.c.l.b16 %v372
    %v385 = vunpack.c.l.b16 %v373
    %v386 = vpack.c.b16 %v383, %v382
    %v387 = vpack.c.b16 %v385, %v384
    %390 = vmatprep.subr.bf16.mxu0 0
    %391 = vmatpush1.bf16.msra.mxu0 %v386
    %392 = vmatprep.subr.bf16.mxu0 0
    %393 = vmatpush1.bf16.msra.mxu0 %v387
    %394 = vmatprep.subr.bf16.mxu0 0
    %395 = vmatpush1.bf16.msra.mxu0 0
    %396 = vmatprep.subr.bf16.mxu0 0
    %397 = vmatpush1.bf16.msra.mxu0 0
    %398 = vmatprep.subr.bf16.mxu0 0
    %399 = vmatpush1.bf16.msra.mxu0 0
    %400 = vmatprep.subr.bf16.mxu0 0
    %401 = vmatpush1.bf16.msra.mxu0 0
    %402 = vmatprep.subr.bf16.mxu0 0
    %403 = vmatpush1.bf16.msra.mxu0 0
    %404 = vmatprep.subr.bf16.mxu0 0
    %405 = vmatpush1.bf16.msra.mxu0 0
    %406 = vmatprep.subr.bf16.mxu0 0
    %407 = vmatpush1.bf16.msra.mxu0 0
    %408 = vmatprep.subr.bf16.mxu0 0
    %409 = vmatpush1.bf16.msra.mxu0 0
    %410 = vmatprep.subr.bf16.mxu0 0
    %411 = vmatpush1.bf16.msra.mxu0 0
    %412 = vmatprep.subr.bf16.mxu0 0
    %413 = vmatpush1.bf16.msra.mxu0 0
    %414 = vmatprep.subr.bf16.mxu0 0
    %415 = vmatpush1.bf16.msra.mxu0 0
    %416 = vmatprep.subr.bf16.mxu0 0
    %417 = vmatpush1.bf16.msra.mxu0 0
    %418 = vmatprep.subr.bf16.mxu0 0
    %419 = vmatpush1.bf16.msra.mxu0 0
    %420 = vmatprep.subr.bf16.mxu0 0
    %421 = vmatpush1.bf16.msra.mxu0 0
    %422 = vmatprep.mubr.bf16.mxu0 0
    %423 = vmatmul.mubr.bf16.gmra.mrb[0].mxu0 %v328
    %v424 = vpop.f32.mrb[0].mxu0
    %v425 = vadd.f32 %v377, %v424
    %v426 = vpop.f32.mrb[0].mxu0
    %v427 = vpop.f32.mrb[0].mxu0
    %v428 = vpop.f32.mrb[0].mxu0
    %429 = vdwg.mxu0
    %v430 = vsel %vm139, %v243, 0.0
    %v431 = vrot.slane %v430, 4
    %v432 = vadd.f32 %v430, %v431
    %v433 = vrot.slane %v432, 2
    %v434 = vadd.f32 %v432, %v433
    %v435 = vrot.slane %v434, 1
    %v436 = vadd.f32 %v434, %v435
    %v437 = vmul.f32 %v436, 0.125
    %v438 = vsub.f32 %v243, %v437
    %v439 = vmul.f32 %v438, %v438
    %v440 = vsel %vm139, %v439, 0.0
    %v441 = vrot.slane %v440, 4
    %v442 = vadd.f32 %v440, %v441
    %v443 = vrot.slane %v442, 2
    %v444 = vadd.f32 %v442, %v443
    %v445 = vrot.slane %v444, 1
    %v446 = vadd.f32 %v444, %v445
    %v447 = vmul.f32 %v446, 0.125
    %v448 = vadd.f32 %v447, 1e-05
    %v449 = vrsqrt.pop %v448
    %v450 = vmul.f32 %v438, %v449
    %v451 = vlaneseq
    %v452 = vshrl.u32 %v451, 7
    %v453 = vsub.s32 0, %v452
    %v454 = vrot.slane %v114, %v453
    %v455 = vmul.f32 %v450, %v454
    %v456 = vlaneseq
    %v457 = vshrl.u32 %v456, 7
    %v458 = vsub.s32 0, %v457
    %v459 = vrot.slane %v115, %v458
    %v460 = vadd.f32 %v455, %v459
    %v461 = vmul.f32 %v460, %v365
    %v462 = vadd.f32 %v461, %v425
    %v463 = vmax.f32 %v462, 0.0
    %v464 = vadd.f32 %v183, %v463
    %465 = vst.msk [vmem:[#allocation13] sm:$0xff] %vm139, %v464
    // Predicated region
    $region58: #{residual_block_forward.1} parent=1 // pred_check
      _
    $region59: #{residual_block_forward.1} parent=1 // pred_check_branch
      %467 = sbr.rel (0) target = $region61
    $region60: #{residual_block_forward.1} parent=1 // pred_region
      %s469 = ssub.s32 128, 128
      %470 = vsyncadd [#allocation4], %s469
      %s472 = sshll.u32 [#allocation13], 4
      %s473 = int_to_ptr.vmem [resolvable:$true] %s472
      %475 = dma.vmem_to_hbm [thread:$0]  %s473, 128, %s8, [#allocation4]
    $region61: #{residual_block_forward.1} parent=1 // pred_fallthru
      _
    // Predicated region
    $region62: #{residual_block_forward.1} parent=1 // pred_check
      _
    $region63: #{residual_block_forward.1} parent=1 // pred_check_branch
      %477 = sbr.rel (0) target = $region65
    $region64: #{residual_block_forward.1} parent=1 // pred_region
      %478 = dma.done [#allocation4], 128
    $region65: #{residual_block_forward.1} parent=1 // pred_fallthru
      _
    %479 = vsyncpa [#allocation3], 1
    %480 = vsyncpa [#allocation6], 1
    %481 = vsyncpa [#allocation9], 1
    %482 = vsyncpa [#allocation12], 1
    %483 = vsyncpa [#allocation4], 1

</llo_original>
